<compile_context>
chip_gen: v7x
topology: tpu7x:2x2x1
jax: 0.10.0
libtpu: 0.0.40
codegen_flags: <defaults>
</compile_context>

<pallas_src>
import functools

import jax
import jax.numpy as jnp
from jax.experimental import pallas as pl
from jax.experimental.pallas import tpu as pltpu


EPS = 1e-6
LANE = 128


def _layernorm_kernel(alpha_ref, beta_ref, x_ref, o_ref, *, hidden):
    """Per-row LayerNorm over the last (lane) dimension.

    alpha_ref / beta_ref : (1,) f32 scalars in SMEM (scalar prefetch).
    x_ref / o_ref        : (tile_rows, H_padded) tiles in VMEM.
    `hidden` is the true feature width; lanes >= hidden (if any) hold zero
    padding added by the wrapper and are excluded from the statistics.
    """
    x = x_ref[...].astype(jnp.float32)   # no-op for f32 inputs
    h_pad = x.shape[-1]

    # Padded lanes are zero, so a plain sum already equals the masked sum.
    mean = jnp.sum(x, axis=-1, keepdims=True) * (1.0 / hidden)

    # Two-pass centered variance (numerically safe vs E[x^2] - E[x]^2).
    centered = x - mean
    if hidden != h_pad:
        lane = jax.lax.broadcasted_iota(jnp.int32, x.shape, x.ndim - 1)
        centered = jnp.where(lane < hidden, centered, 0.0)
    # torch.std default is the unbiased estimator (divide by N-1).
    var = jnp.sum(centered * centered, axis=-1, keepdims=True) * (
        1.0 / (hidden - 1))
    std = jnp.sqrt(var)

    # Exact per-row reciprocal: the column is only (tile_rows, 1), so the
    # "EUP is free" saving of approx=True is negligible while its bf16-level
    # error would swamp eps=1e-6.
    inv = 1.0 / (std + EPS)

    # Folded affine: y = x * k + (beta - mean * k).  `centered` is no longer
    # live here, and the full-tile work is one mul + one add.
    k = alpha_ref[0] * inv                  # (tile_rows, 1)
    bias = beta_ref[0] - mean * k           # (tile_rows, 1)
    o_ref[...] = (x * k + bias).astype(o_ref.dtype)


def _tpu_memory_info():
    """Return (physical per-core VMEM bytes, multi-TensorCore chip?).

    Falls back to conservative v7x numbers if the query is unavailable.
    """
    vmem_phys = 64 << 20                      # conservative default (v7x)
    try:
        info = pltpu.get_tpu_info()
        for name in ("vmem_capacity_bytes", "vmem_size_bytes"):
            v = getattr(info, name, None)
            if v:
                vmem_phys = int(v)
                break
    except Exception:
        pass
    # v7x is the only generation with 2 TensorCores per chip, and the only one
    # with 64 MiB (vs 128 MiB) per-core VMEM -- use that as the signature.
    multi_tc = vmem_phys <= (64 << 20)
    return vmem_phys, multi_tc


def _choose_tile_rows(rows, hidden_padded, itemsize, *, vmem_phys, multi_tc):
    """Row-tile heuristic for a pure HBM-streaming LayerNorm."""
    # Sublane multiple for the packed dtype (f32: 8, bf16: 16, 8-bit: 32).
    sub = {4: 8, 2: 16, 1: 32}.get(itemsize, 8)

    row_io = hidden_padded * itemsize         # bytes per row at the I/O dtype
    row_f32 = hidden_padded * 4               # bytes per row of f32 temps

    # VMEM per tile-row: 2 input + 2 output double-buffers at the I/O dtype
    # plus ~2 live full-tile f32 temporaries inside the kernel.  Budget ~60%
    # of physical VMEM; vmem_limit below is set to 75% for headroom.
    per_row = 4 * row_io + 2 * row_f32
    t_vmem = max(1, (int(vmem_phys * 0.6)) // per_row)

    # Bandwidth target: ~8 MiB of I/O bytes per tile (per-step fixed cost is
    # ~0.35 us; HBM-roofline fraction climbs steeply with tile size).
    t_target = max(1, (8 << 20) // row_io)

    t = min(t_vmem, t_target, 4096)
    t = max(sub, (t // sub) * sub)

    # Never allocate a block taller than the (rounded-up) input.
    t = min(t, -(-rows // sub) * sub)
    t = max(sub, t)

    if multi_tc and rows >= 512:
        steps = -(-rows // t)
        if steps == 1:
            # Split a single resident tile so both v7x TensorCores get work.
            t = max(sub, ((-(-rows // 2) + sub - 1) // sub) * sub)
        elif steps % 2 == 1:
            # Prefer an even step count so megacore sharding is balanced.
            t_even = max(sub, ((-(-rows // (steps + 1)) + sub - 1) // sub) * sub)
            if (-(-rows // t_even)) % 2 == 0:
                t = t_even
    return t


def layer_normalization(x2d, alpha, beta, *, tile_rows=None):
    """x2d: (rows, H) array. Returns LayerNorm'd array of same shape/dtype."""
    rows, hidden = x2d.shape

    alpha = jnp.asarray(alpha, jnp.float32).reshape(1)
    beta = jnp.asarray(beta, jnp.float32).reshape(1)

    # Narrow features (< one 128-lane) would lower to masked vst.msk partial
    # stores; pad to a lane-dense slab and mask the statistics in-kernel.
    # TODO(synk): hidden >= 128 but not a multiple of 128 still takes the
    # masked-tail store path; typical transformer widths are 128-multiples.
    hidden_padded = hidden
    x_in = x2d
    if hidden < LANE:
        hidden_padded = LANE
        x_in = jnp.pad(x2d, ((0, 0), (0, LANE - hidden)))

    itemsize = jnp.dtype(x_in.dtype).itemsize
    vmem_phys, multi_tc = _tpu_memory_info()
    if tile_rows is None:
        tile_rows = _choose_tile_rows(rows, hidden_padded, itemsize,
                                      vmem_phys=vmem_phys, multi_tc=multi_tc)

    # cdiv grid: the ragged last row-block is padded on read / masked on
    # write by Pallas, which is safe because the reduction is per-row.
    grid = (pl.cdiv(rows, tile_rows),)

    tile_io_bytes = tile_rows * hidden_padded * itemsize
    tile_f32_bytes = tile_rows * hidden_padded * 4
    # 2 in + 2 out double-buffers + ~2 live f32 temps + headroom, capped at
    # 75% of physical per-core VMEM (~48 MiB v7x, ~96 MiB v5e/v6e).
    vmem_limit = int(min(int(vmem_phys * 0.75),
                         max(32 << 20,
                             4 * tile_io_bytes + 2 * tile_f32_bytes + (4 << 20))))

    kernel = functools.partial(_layernorm_kernel, hidden=hidden)

    out = pl.pallas_call(
        kernel,
        out_shape=jax.ShapeDtypeStruct((rows, hidden_padded), x_in.dtype),
        grid_spec=pltpu.PrefetchScalarGridSpec(
            num_scalar_prefetch=2,       # alpha, beta -> SMEM scalars
            grid=grid,
            in_specs=[
                pl.BlockSpec((tile_rows, hidden_padded),
                             lambda i, a, b: (i, 0)),
            ],
            out_specs=pl.BlockSpec((tile_rows, hidden_padded),
                                   lambda i, a, b: (i, 0)),
        ),
        compiler_params=pltpu.CompilerParams(
            dimension_semantics=("parallel",),
            vmem_limit_bytes=vmem_limit,
        ),
    )(alpha, beta, x_in)

    if hidden_padded != hidden:
        out = out[:, :hidden]
    return out


class Decoder:
    """JAX/Pallas equivalent of the PyTorch Decoder module."""

    def __init__(self, n_layers: int):
        self.n_layers = n_layers
        # LayerNormalization parameters (deterministic init per nn.Module):
        # alpha = ones(1), beta = zeros(1)
        self.alpha = jnp.ones((1,), jnp.float32)
        self.beta = jnp.zeros((1,), jnp.float32)

    def __call__(self, x, encoder_output, src_mask, tgt_mask):
        # TODO(synk): decoder-layer blocks undefined in reference -> identity.
        b, s, h = x.shape
        x2d = x.reshape(b * s, h)
        y2d = layer_normalization(x2d, self.alpha, self.beta)
        return y2d.reshape(b, s, h)


def _ref_layernorm(v):
    v = v.astype(jnp.float32)
    mean = v.mean(-1, keepdims=True)
    std = jnp.sqrt(((v - mean) ** 2).sum(-1, keepdims=True) / (v.shape[-1] - 1))
    return 1.0 * (v - mean) / (std + EPS) + 0.0


if __name__ == "__main__":
    key = jax.random.PRNGKey(0)
    k0, k1 = jax.random.split(key)

    decoder = Decoder(n_layers=2)

    # 1) Module-consistent small shapes (hidden < 128 -> lane-dense pad path).
    batch, seq, hidden = 2, 8, 32
    x = jax.random.normal(k0, (batch, seq, hidden), jnp.float32)
    encoder_output = jax.random.normal(k1, (batch, seq, hidden), jnp.float32)
    src_mask = jnp.ones((batch, 1, 1, seq), jnp.float32)
    tgt_mask = jnp.ones((batch, 1, seq, seq), jnp.float32)

    out = jax.block_until_ready(decoder(x, encoder_output, src_mask, tgt_mask))
    ref = _ref_layernorm(x)
    assert out.shape == (batch, seq, hidden)
    assert jnp.allclose(out, ref, atol=3e-5, rtol=1e-5), float(
        jnp.max(jnp.abs(out - ref)))

    # 2) Rows not divisible by the sublane multiple, lane-dense hidden of 128
    #    (exercises the ragged-tail / padded-row path).
    b2, s2, h2 = 3, 5, 128
    x2 = jax.random.normal(jax.random.PRNGKey(1), (b2, s2, h2), jnp.float32)
    out2 = jax.block_until_ready(decoder(x2, x2, None, None))
    assert out2.shape == (b2, s2, h2)
    assert jnp.allclose(out2, _ref_layernorm(x2), atol=3e-5, rtol=1e-5)

    # 3) A moderately sized input that exercises the real tiling / megacore
    #    balancing path (rows = 2048, hidden = 512).
    b3, s3, h3 = 4, 512, 512
    x3 = jax.random.normal(jax.random.PRNGKey(2), (b3, s3, h3), jnp.float32)
    out3 = jax.block_until_ready(decoder(x3, x3, None, None))
    assert out3.shape == (b3, s3, h3)
    assert jnp.allclose(out3, _ref_layernorm(x3), atol=3e-5, rtol=1e-5)

    print("KERNEL_OK")
</pallas_src>

<mosaic_0001>
module attributes {stable_mosaic.version = 11 : i64} {
  func.func @_layernorm_kernel(%arg0: i32, %arg1: memref<1xf32, #tpu.memory_space<smem>>, %arg2: memref<1xf32, #tpu.memory_space<smem>>, %arg3: memref<16x128xf32, #tpu.memory_space<vmem>>, %arg4: memref<16x128xf32, #tpu.memory_space<vmem>>) attributes {dimension_semantics = [#tpu.dimension_semantics<parallel>], iteration_bounds = array<i64: 1>, scalar_prefetch = 2 : i64, scratch_operands = 0 : i64, tpu.core_type = #tpu.core_type<tc>, window_params = [{transform_indices = @transform_0, window_bounds = array<i64: 16, 128>}, {transform_indices = @transform_1, window_bounds = array<i64: 16, 128>}]} {
    %c0 = arith.constant 0 : index
    %c0_0 = arith.constant 0 : index
    %0 = vector.load %arg3[%c0, %c0_0] : memref<16x128xf32, #tpu.memory_space<vmem>>, vector<16x128xf32>
    %cst = arith.constant dense<0.000000e+00> : vector<16xf32>
    %1 = vector.multi_reduction <add>, %0, %cst [1] : vector<16x128xf32> to vector<16xf32>
    %2 = vector.shape_cast %1 : vector<16xf32> to vector<16x1xf32>
    %cst_1 = arith.constant 3.125000e-02 : f32
    %3 = vector.broadcast %cst_1 : f32 to vector<16x1xf32>
    %4 = arith.mulf %2, %3 : vector<16x1xf32>
    %5 = vector.broadcast %4 : vector<16x1xf32> to vector<16x128xf32>
    %6 = arith.subf %0, %5 : vector<16x128xf32>
    %7 = tpu.iota {dimensions = array<i32: 1>} : vector<16x128xi32>
    %c32_i32 = arith.constant 32 : i32
    %8 = vector.broadcast %c32_i32 : i32 to vector<16x128xi32>
    %9 = arith.cmpi slt, %7, %8 : vector<16x128xi32>
    %cst_2 = arith.constant 0.000000e+00 : f32
    %10 = vector.broadcast %cst_2 : f32 to vector<16x128xf32>
    %11 = arith.select %9, %6, %10 : vector<16x128xi1>, vector<16x128xf32>
    %12 = arith.mulf %11, %11 : vector<16x128xf32>
    %cst_3 = arith.constant dense<0.000000e+00> : vector<16xf32>
    %13 = vector.multi_reduction <add>, %12, %cst_3 [1] : vector<16x128xf32> to vector<16xf32>
    %14 = vector.shape_cast %13 : vector<16xf32> to vector<16x1xf32>
    %cst_4 = arith.constant 0.0322580636 : f32
    %15 = vector.broadcast %cst_4 : f32 to vector<16x1xf32>
    %16 = arith.mulf %14, %15 : vector<16x1xf32>
    %17 = math.sqrt %16 : vector<16x1xf32>
    %cst_5 = arith.constant 9.99999997E-7 : f32
    %18 = vector.broadcast %cst_5 : f32 to vector<16x1xf32>
    %19 = arith.addf %17, %18 : vector<16x1xf32>
    %cst_6 = arith.constant 1.000000e+00 : f32
    %20 = vector.broadcast %cst_6 : f32 to vector<16x1xf32>
    %21 = arith.divf %20, %19 : vector<16x1xf32>
    %c0_7 = arith.constant 0 : index
    %22 = memref.load %arg1[%c0_7] : memref<1xf32, #tpu.memory_space<smem>>
    %23 = vector.broadcast %22 : f32 to vector<16x1xf32>
    %24 = arith.mulf %23, %21 : vector<16x1xf32>
    %c0_8 = arith.constant 0 : index
    %25 = memref.load %arg2[%c0_8] : memref<1xf32, #tpu.memory_space<smem>>
    %26 = arith.mulf %4, %24 : vector<16x1xf32>
    %27 = vector.broadcast %25 : f32 to vector<16x1xf32>
    %28 = arith.subf %27, %26 : vector<16x1xf32>
    %29 = vector.broadcast %24 : vector<16x1xf32> to vector<16x128xf32>
    %30 = arith.mulf %0, %29 : vector<16x128xf32>
    %31 = vector.broadcast %28 : vector<16x1xf32> to vector<16x128xf32>
    %32 = arith.addf %30, %31 : vector<16x128xf32>
    %c0_9 = arith.constant 0 : index
    %c0_10 = arith.constant 0 : index
    %33 = vector.load %arg4[%c0_9, %c0_10] : memref<16x128xf32, #tpu.memory_space<vmem>>, vector<16x128xf32>
    tpu.vector_store %arg4[%c0_9, %c0_10], %32 {strides = array<i32>} : memref<16x128xf32, #tpu.memory_space<vmem>>, vector<16x128xf32>,
    return
  }
  func.func @transform_0(%arg0: i32, %arg1: memref<1xf32, #tpu.memory_space<smem>>, %arg2: memref<1xf32, #tpu.memory_space<smem>>) -> (i32, i32) {
    %c0_i32 = arith.constant 0 : i32
    %c0_i32_0 = arith.constant 0 : i32
    return %arg0, %c0_i32 : i32, i32
  }
  func.func @transform_1(%arg0: i32, %arg1: memref<1xf32, #tpu.memory_space<smem>>, %arg2: memref<1xf32, #tpu.memory_space<smem>>) -> (i32, i32) {
    %c0_i32 = arith.constant 0 : i32
    %c0_i32_0 = arith.constant 0 : i32
    return %arg0, %c0_i32 : i32, i32
  }
}

</mosaic_0001>

<llo_original>
// kernel: tpu_custom_call.1
$region0: #{tpu_custom_call.1}
  #allocation0 [shape = 'u32[]', space=smem, size = 0x4, offset = 0x4, fixed_abs, tag = 'smem constant byte address 0x4 - core index']
  #allocation1 [shape = 'u32[144,128]{1,0:T(1,128)}', space=vmem, size = 0x12000, scoped, tag = 'internal scratch']
  #allocation2 [shape = 's32[1]{0}', space=sflag, size = 0x4, scoped, tag = 'scoped memory for tpu_custom_call.1']
  #allocation3 [shape = 'f32[1]{0:T(128)S(6)}', space=smem, size = 0x200, scoped, tag = 'prefetched SMEM operand 0']
  #allocation4 [shape = 'f32[1]{0:T(128)S(6)}', space=smem, size = 0x200, scoped, tag = 'prefetched SMEM operand 1']
  %s0 = inlined_call_operand.<no memory space> [shape: f32[1], index: 0, kind: input, shape index: {}]
  %s1 = inlined_call_operand.<no memory space> [shape: f32[1], index: 1, kind: input, shape index: {}]
  %s2 = inlined_call_operand.hbm [shape: f32[16,128], index: 2, kind: input, shape index: {}]
  %s3 = inlined_call_operand.hbm [shape: f32[16,128], index: 3, kind: output, shape index: {}]
  %s4 = sld [smem:[#allocation0]]
  $region18: #{tpu_custom_call.1} parent=0
    _
  %s6 = ssub.s32 1, %s4
  %s7 = scalar_select 0, %s6, %s4
  %8 = sst [smem:[#allocation3]] %s0
  %9 = sst [smem:[#allocation4]] %s1
  $region1: #{tpu_custom_call.1} parent=0
    #allocation5 [shape = 'u8[8192]{0}', space=vmem, size = 0x2000, scoped, tag = 'input window, operand 2, single buffered']
    #allocation6 [shape = 's32[1]{0}', space=sflag, size = 0x4, scoped, tag = 'scoped memory for tpu_custom_call.1']
    #allocation7 [shape = 's32[1]{0}', space=sflag, size = 0x4, scoped, tag = 'scoped memory for tpu_custom_call.1']
    #allocation8 [shape = 'u8[8192]{0}', space=vmem, size = 0x2000, scoped, tag = 'output window, operand 0, single buffered']
    %10 = vsyncpa [#allocation6], 0
    %11 = vsyncpa [#allocation7], 0
    // Predicated region
    $region2: #{tpu_custom_call.1} parent=1 // pred_check
      _
    $region3: #{tpu_custom_call.1} parent=1 // pred_check_branch
      %13 = sbr.rel (0) target = $region5
    $region4: #{tpu_custom_call.1} parent=1 // pred_region
      %s15 = ssub.s32 256, 256
      %16 = vsyncadd [#allocation6], %s15
      %s17 = sshll.u32 [#allocation5], 4
      %s18 = int_to_ptr.vmem [resolvable:$true] %s17
      %23 = dma.hbm_to_vmem [thread:$0]  %s2, 256, %s18, [#allocation6], 128, 128, 8
    $region5: #{tpu_custom_call.1} parent=1 // pred_fallthru
      _
    // Predicated region
    $region6: #{tpu_custom_call.1} parent=1 // pred_check
      _
    $region7: #{tpu_custom_call.1} parent=1 // pred_check_branch
      %25 = sbr.rel (0) target = $region9
    $region8: #{tpu_custom_call.1} parent=1 // pred_region
      %26 = dma.done [#allocation6], 256
    $region9: #{tpu_custom_call.1} parent=1 // pred_fallthru
      _
    %v27 = vld [vmem:[#allocation5] sm:$0xff]
    %v28 = vld [vmem:[#allocation5 + $0x8] sm:$0xff]
    %29 = vadd.xlane.f32.xlu0 %v27
    %v30 = vpop.xlane.xlu0 %29
    %31 = vadd.xlane.f32.xlu0 %v28
    %v32 = vpop.xlane.xlu0 %31
    %v33 = vmul.f32 %v30, 0.03125
    %v34 = vmul.f32 %v32, 0.03125
    %v35 = vsub.f32 %v27, %v33
    %v36 = vsub.f32 %v28, %v34
    %v37 = vlaneseq
    %v38 = vand.u32 %v37, 127
    %vm39 = vcmp.lt.s32.totalorder %v38, 32
    %v40 = vsel %vm39, %v35, 0.0
    %v41 = vsel %vm39, %v36, 0.0
    %v42 = vmul.f32 %v40, %v40
    %v43 = vmul.f32 %v41, %v41
    %44 = vadd.xlane.f32.xlu0 %v42
    %v45 = vpop.xlane.xlu0 %44
    %46 = vadd.xlane.f32.xlu0 %v43
    %v47 = vpop.xlane.xlu0 %46
    %v48 = vmul.f32 %v45, 0.032258064
    %v49 = vmul.f32 %v47, 0.032258064
    %v50 = vrsqrt.pop %v48
    %v51 = vmul.f32 %v48, %v50
    %vm52 = vcmp.eq.f32.partialorder %v48, inf
    %v53 = vsel %vm52, %v48, %v51
    %vm54 = vcmp.eq.f32.partialorder %v48, 0.0
    %v55 = vand.u32 %v48, 2147483648
    %v56 = vsel %vm54, %v55, %v53
    %v57 = vrsqrt.pop %v49
    %v58 = vmul.f32 %v49, %v57
    %vm59 = vcmp.eq.f32.partialorder %v49, inf
    %v60 = vsel %vm59, %v49, %v58
    %vm61 = vcmp.eq.f32.partialorder %v49, 0.0
    %v62 = vand.u32 %v49, 2147483648
    %v63 = vsel %vm61, %v62, %v60
    %v64 = vadd.f32 %v56, 1e-06
    %v65 = vadd.f32 %v63, 1e-06
    %v66 = vrcp.pop %v64
    %v67 = vmul.f32 1.0, %v66
    %v68 = vrcp.pop %v65
    %v69 = vmul.f32 1.0, %v68
    %s70 = sld [smem:[#allocation3]]
    %v71 = vstv %s70
    %v72 = vmul.f32 %v71, %v67
    %v73 = vmul.f32 %v71, %v69
    %s74 = sld [smem:[#allocation4]]
    %v75 = vmul.f32 %v33, %v72
    %v76 = vmul.f32 %v34, %v73
    %v77 = vstv %s74
    %v78 = vsub.f32 %v77, %v75
    %v79 = vsub.f32 %v77, %v76
    %v80 = vmul.f32 %v27, %v72
    %v81 = vmul.f32 %v28, %v73
    %v82 = vadd.f32 %v80, %v78
    %v83 = vadd.f32 %v81, %v79
    %84 = vst [vmem:[#allocation8] sm:$0xff] %v82
    %85 = vst [vmem:[#allocation8 + $0x8] sm:$0xff] %v83
    // Predicated region
    $region10: #{tpu_custom_call.1} parent=1 // pred_check
      _
    $region11: #{tpu_custom_call.1} parent=1 // pred_check_branch
      %87 = sbr.rel (0) target = $region13
    $region12: #{tpu_custom_call.1} parent=1 // pred_region
      %s89 = ssub.s32 256, 256
      %90 = vsyncadd [#allocation7], %s89
      %s91 = sshll.u32 [#allocation8], 4
      %s92 = int_to_ptr.vmem [resolvable:$true] %s91
      %97 = dma.vmem_to_hbm [thread:$0]  %s92, 256, %s3, [#allocation7], 128, 128, 8
    $region13: #{tpu_custom_call.1} parent=1 // pred_fallthru
      _
    // Predicated region
    $region14: #{tpu_custom_call.1} parent=1 // pred_check
      _
    $region15: #{tpu_custom_call.1} parent=1 // pred_check_branch
      %99 = sbr.rel (0) target = $region17
    $region16: #{tpu_custom_call.1} parent=1 // pred_region
      %100 = dma.done [#allocation7], 256
    $region17: #{tpu_custom_call.1} parent=1 // pred_fallthru
      _
    %101 = vsyncpa [#allocation6], 1
    %102 = vsyncpa [#allocation7], 1

</llo_original>
